<compile_context>
chip_gen: v5e
topology: v5e:2x2
jax: 0.10.0
libtpu: 0.0.40
codegen_flags: <defaults>
</compile_context>

<pallas_src>
import functools
import math

import jax
import jax.numpy as jnp
from jax.experimental import pallas as pl
from jax.experimental.pallas import tpu as pltpu

_INV_SQRT2 = 0.7071067811865476
_SQRT_2_OVER_PI = 0.7978845608028654


def _ffn_kernel(x_ref, w1_ref, b1_ref, w2_ref, b2_ref, o_ref, acc_ref, *,
                compute_dtype, gelu_approx):
    hk = pl.program_id(1)

    @pl.when(hk == 0)
    def _():
        acc_ref[...] = jnp.zeros_like(acc_ref)

    # Cast the activation tile in-kernel (x streamed in native dtype).
    xb = x_ref[...].astype(compute_dtype)
    # First matmul against the current hidden panel; f32 accumulation.
    h = jnp.dot(xb, w1_ref[...], preferred_element_type=jnp.float32)
    h = h + b1_ref[...].astype(jnp.float32)
    if gelu_approx:
        # tanh-approx GELU: keeps the transcendental on the EUP slot.
        h = 0.5 * h * (1.0 + jnp.tanh(_SQRT_2_OVER_PI * (h + 0.044715 * h * h * h)))
    else:
        # Exact erf GELU (PyTorch nn.GELU default), on the f32 accumulator.
        h = 0.5 * h * (1.0 + jax.lax.erf(h * _INV_SQRT2))
    # Dropout(p=0.0) -> identity (eval-mode semantics).
    h = h.astype(compute_dtype)
    # Second matmul: partial (tm, D) contribution of this hidden panel.
    acc_ref[...] += jnp.dot(h, w2_ref[...], preferred_element_type=jnp.float32)

    @pl.when(hk == pl.num_programs(1) - 1)
    def _():
        o_ref[...] = (acc_ref[...] + b2_ref[...].astype(jnp.float32)).astype(o_ref.dtype)


def _default_vmem_limit_bytes():
    # Generation-aware: ~80% of physical VMEM (v5e/v6e: ~102 MiB, v7x: ~51 MiB).
    try:
        cap = pltpu.get_tpu_info().vmem_capacity_bytes
    except Exception:
        cap = 64 * 1024 * 1024
    return int(cap * 0.8)


def _pick_row_tile(M, block_m):
    """Row tile: big (256-512) on every generation; prefer tm | M over pad+slice."""
    block_m = max(8, block_m - block_m % 8)
    if M <= block_m:
        return M, M                      # single full-extent tile, no padding needed
    if M % block_m == 0:
        return block_m, M
    if M % 8 == 0:
        # Slightly smaller tile that divides M exactly (skips pad + trailing slice).
        for tm in range(block_m, block_m // 2 - 1, -8):
            if M % tm == 0:
                return tm, M
    # Ragged fallback: pad the last row tile (padded rows computed on zeros, sliced off).
    return block_m, pl.cdiv(M, block_m) * block_m


def _pick_hidden_tile(H, max_th):
    if H <= max_th:
        return H
    for th in (512, 384, 256, 128):
        if th <= max_th and H % th == 0:
            return th
    return H  # awkward H: no hidden tiling


def feedforward_pallas(x, w1, b1, w2, b2, *,
                       block_m=512,
                       hidden_block=512,
                       compute_dtype=jnp.bfloat16,
                       out_dtype=None,
                       gelu_approx=False,
                       vmem_limit_bytes=None):
    """x: (B, S, D).  w1: (D, H), b1: (H,), w2: (H, D), b2: (D,)."""
    B, S, D = x.shape
    H = w1.shape[1]
    assert w1.shape == (D, H) and w2.shape == (H, D)
    assert b1.shape == (H,) and b2.shape == (D,)

    out_dtype = x.dtype if out_dtype is None else out_dtype
    if vmem_limit_bytes is None:
        vmem_limit_bytes = _default_vmem_limit_bytes()

    M = B * S
    tm, Mp = _pick_row_tile(M, block_m)
    th = _pick_hidden_tile(H, hidden_block)
    n_m = Mp // tm
    n_h = H // th

    # x stays in its native dtype (cast happens on the tile inside the kernel).
    x2 = x.reshape(M, D)
    if Mp != M:
        x2 = jnp.pad(x2, ((0, Mp - M), (0, 0)))

    # Weights in compute dtype (bf16 MXU path); biases stay f32, added on the f32 accumulator.
    w1c = w1.astype(compute_dtype)
    w2c = w2.astype(compute_dtype)
    b1_2d = b1.reshape(1, H).astype(jnp.float32)
    b2_2d = b2.reshape(1, D).astype(jnp.float32)

    # Streamed hidden panels: double-buffered.  Constant-index blocks: single-buffered
    # (double-buffering a block that never changes is pure VMEM waste).
    panel_buf = pl.Buffered(1) if n_h == 1 else pl.Buffered(2)
    const_buf = pl.Buffered(1)

    csize = jnp.dtype(compute_dtype).itemsize
    cost = pl.CostEstimate(
        flops=4 * Mp * D * H,                          # two matmuls: 2*M*D*H each
        transcendentals=Mp * H,                        # activation on the hidden elements
        bytes_accessed=(Mp * D * (jnp.dtype(x.dtype).itemsize
                                  + jnp.dtype(out_dtype).itemsize)
                        + 2 * D * H * csize
                        + 4 * (H + D)),
    )

    kernel = functools.partial(_ffn_kernel,
                               compute_dtype=compute_dtype,
                               gelu_approx=gelu_approx)

    out = pl.pallas_call(
        kernel,
        out_shape=jax.ShapeDtypeStruct((Mp, D), out_dtype),
        grid_spec=pltpu.PrefetchScalarGridSpec(
            num_scalar_prefetch=0,
            grid=(n_m, n_h),
            in_specs=[
                # x row tile: block index constant across hk -> fetched once per row tile.
                pl.BlockSpec((tm, D), lambda i, hk: (i, 0)),
                # w1 hidden panel (D, th), streamed along hk.
                pl.BlockSpec((D, th), lambda i, hk: (0, hk), pipeline_mode=panel_buf),
                # b1 hidden panel (1, th).
                pl.BlockSpec((1, th), lambda i, hk: (0, hk), pipeline_mode=panel_buf),
                # w2 hidden panel (th, D), streamed along hk.
                pl.BlockSpec((th, D), lambda i, hk: (hk, 0), pipeline_mode=panel_buf),
                # b2: constant block -> single-buffered.
                pl.BlockSpec((1, D), lambda i, hk: (0, 0), pipeline_mode=const_buf),
            ],
            out_specs=pl.BlockSpec((tm, D), lambda i, hk: (i, 0)),
            scratch_shapes=[pltpu.VMEM((tm, D), jnp.float32)],   # f32 output accumulator
        ),
        compiler_params=pltpu.CompilerParams(
            dimension_semantics=("parallel", "arbitrary"),   # rows across TCs, hidden reduction serial
            vmem_limit_bytes=vmem_limit_bytes,
        ),
        cost_estimate=cost,
    )(x2, w1c, b1_2d, w2c, b2_2d)

    if Mp != M:
        out = out[:M]
    return out.reshape(B, S, D)


def _reference(x, w1, b1, w2, b2, compute_dtype=jnp.bfloat16):
    # Emulates the kernel's precision policy: bf16 MXU operands, f32 accumulation,
    # exact-erf GELU on the f32 accumulator.
    xb = x.astype(compute_dtype)
    h = jnp.dot(xb, w1.astype(compute_dtype),
                preferred_element_type=jnp.float32) + b1.astype(jnp.float32)
    h = 0.5 * h * (1.0 + jax.lax.erf(h * _INV_SQRT2))
    h = h.astype(compute_dtype)
    o = jnp.dot(h, w2.astype(compute_dtype),
                preferred_element_type=jnp.float32) + b2.astype(jnp.float32)
    return o.astype(x.dtype)


if __name__ == "__main__":
    # Small shapes consistent with the module: (batch=2, seq=8, dim=32), hidden_dim=64
    B, S, D, H = 2, 8, 32, 64
    key = jax.random.PRNGKey(0)
    kx, kw1, kb1, kw2, kb2 = jax.random.split(key, 5)

    x = jax.random.normal(kx, (B, S, D), dtype=jnp.float32)

    # Deterministic init mimicking nn.Linear: U(-1/sqrt(fan_in), 1/sqrt(fan_in))
    lim1 = 1.0 / math.sqrt(D)
    lim2 = 1.0 / math.sqrt(H)
    w1 = jax.random.uniform(kw1, (D, H), minval=-lim1, maxval=lim1, dtype=jnp.float32)
    b1 = jax.random.uniform(kb1, (H,), minval=-lim1, maxval=lim1, dtype=jnp.float32)
    w2 = jax.random.uniform(kw2, (H, D), minval=-lim2, maxval=lim2, dtype=jnp.float32)
    b2 = jax.random.uniform(kb2, (D,), minval=-lim2, maxval=lim2, dtype=jnp.float32)

    out = feedforward_pallas(x, w1, b1, w2, b2)
    out = jax.block_until_ready(out)

    ref = _reference(x, w1, b1, w2, b2)
    h_f32 = x @ w1 + b1
    ref_f32 = (0.5 * h_f32 * (1.0 + jax.lax.erf(h_f32 * _INV_SQRT2))) @ w2 + b2

    assert out.shape == (B, S, D)
    # Tight check vs the same-precision reference; loose check vs pure-f32 math
    # (bf16 MXU operands round inputs to ~3 decimal digits).
    assert jnp.allclose(out, ref, atol=2e-2, rtol=2e-2), "mismatch vs bf16-path reference"
    assert jnp.allclose(out, ref_f32, atol=5e-2, rtol=5e-2), "mismatch vs f32 reference"

    print("KERNEL_OK")
</pallas_src>

<mosaic_0001>
module attributes {stable_mosaic.version = 11 : i64} {
  func.func @_ffn_kernel(%arg0: i32, %arg1: i32, %arg2: memref<16x32xf32, #tpu.memory_space<vmem>>, %arg3: memref<32x64xbf16, #tpu.memory_space<vmem>>, %arg4: memref<1x64xf32, #tpu.memory_space<vmem>>, %arg5: memref<64x32xbf16, #tpu.memory_space<vmem>>, %arg6: memref<1x32xf32, #tpu.memory_space<vmem>>, %arg7: memref<16x32xf32, #tpu.memory_space<vmem>>, %arg8: memref<16x32xf32, #tpu.memory_space<vmem>>) attributes {dimension_semantics = [#tpu.dimension_semantics<parallel>, #tpu.dimension_semantics<arbitrary>], iteration_bounds = array<i64: 1, 1>, scalar_prefetch = 0 : i64, scratch_operands = 1 : i64, tpu.core_type = #tpu.core_type<tc>, window_params = [{transform_indices = @transform_0, window_bounds = array<i64: 16, 32>}, {pipeline_mode = #tpu.pipeline_mode<synchronous>, transform_indices = @transform_1, window_bounds = array<i64: 32, 64>}, {pipeline_mode = #tpu.pipeline_mode<synchronous>, transform_indices = @transform_2, window_bounds = array<i64: 1, 64>}, {pipeline_mode = #tpu.pipeline_mode<synchronous>, transform_indices = @transform_3, window_bounds = array<i64: 64, 32>}, {pipeline_mode = #tpu.pipeline_mode<synchronous>, transform_indices = @transform_4, window_bounds = array<i64: 1, 32>}, {transform_indices = @transform_5, window_bounds = array<i64: 16, 32>}]} {
    %c0_i32 = arith.constant 0 : i32
    %0 = arith.cmpi eq, %arg1, %c0_i32 : i32
    %1 = arith.extui %0 : i1 to i32
    %c0_i32_0 = arith.constant 0 : i32
    %2 = arith.cmpi ne, %1, %c0_i32_0 : i32
    scf.if %2 {
      %cst_18 = arith.constant 0.000000e+00 : f32
      %27 = vector.broadcast %cst_18 : f32 to vector<16x32xf32>
      %c0_19 = arith.constant 0 : index
      %c0_20 = arith.constant 0 : index
      %28 = vector.load %arg8[%c0_19, %c0_20] : memref<16x32xf32, #tpu.memory_space<vmem>>, vector<16x32xf32>
      tpu.vector_store %arg8[%c0_19, %c0_20], %27 {strides = array<i32>} : memref<16x32xf32, #tpu.memory_space<vmem>>, vector<16x32xf32>,
    } else {
    }
    %c0 = arith.constant 0 : index
    %c0_1 = arith.constant 0 : index
    %3 = vector.load %arg2[%c0, %c0_1] : memref<16x32xf32, #tpu.memory_space<vmem>>, vector<16x32xf32>
    %4 = arith.truncf %3 : vector<16x32xf32> to vector<16x32xbf16>
    %c0_2 = arith.constant 0 : index
    %c0_3 = arith.constant 0 : index
    %5 = vector.load %arg3[%c0_2, %c0_3] : memref<32x64xbf16, #tpu.memory_space<vmem>>, vector<32x64xbf16>
    %cst = arith.constant dense<0.000000e+00> : vector<16x64xf32>
    %6 = tpu.matmul %4, %5, %cst {dimension_numbers = #tpu.dot_dimension_numbers<[1], [0], [0], [1], [0, 0, 1, 1], [], []>} : vector<16x32xbf16>, vector<32x64xbf16>, vector<16x64xf32> -> vector<16x64xf32>
    %c0_4 = arith.constant 0 : index
    %c0_5 = arith.constant 0 : index
    %7 = vector.load %arg4[%c0_4, %c0_5] : memref<1x64xf32, #tpu.memory_space<vmem>>, vector<1x64xf32>
    %8 = vector.broadcast %7 : vector<1x64xf32> to vector<16x64xf32>
    %9 = arith.addf %6, %8 : vector<16x64xf32>
    %cst_6 = arith.constant 5.000000e-01 : f32
    %10 = vector.broadcast %cst_6 : f32 to vector<16x64xf32>
    %11 = arith.mulf %10, %9 : vector<16x64xf32>
    %cst_7 = arith.constant 0.707106769 : f32
    %12 = vector.broadcast %cst_7 : f32 to vector<16x64xf32>
    %13 = arith.mulf %9, %12 : vector<16x64xf32>
    %14 = math.erf %13 : vector<16x64xf32>
    %cst_8 = arith.constant 1.000000e+00 : f32
    %15 = vector.broadcast %cst_8 : f32 to vector<16x64xf32>
    %16 = arith.addf %15, %14 : vector<16x64xf32>
    %17 = arith.mulf %11, %16 : vector<16x64xf32>
    %18 = arith.truncf %17 : vector<16x64xf32> to vector<16x64xbf16>
    %c0_9 = arith.constant 0 : index
    %c0_10 = arith.constant 0 : index
    %19 = vector.load %arg8[%c0_9, %c0_10] : memref<16x32xf32, #tpu.memory_space<vmem>>, vector<16x32xf32>
    %c0_11 = arith.constant 0 : index
    %c0_12 = arith.constant 0 : index
    %20 = vector.load %arg5[%c0_11, %c0_12] : memref<64x32xbf16, #tpu.memory_space<vmem>>, vector<64x32xbf16>
    %cst_13 = arith.constant dense<0.000000e+00> : vector<16x32xf32>
    %21 = tpu.matmul %18, %20, %cst_13 {dimension_numbers = #tpu.dot_dimension_numbers<[1], [0], [0], [1], [0, 0, 1, 1], [], []>} : vector<16x64xbf16>, vector<64x32xbf16>, vector<16x32xf32> -> vector<16x32xf32>
    %22 = arith.addf %19, %21 : vector<16x32xf32>
    %c0_14 = arith.constant 0 : index
    %c0_15 = arith.constant 0 : index
    %23 = vector.load %arg8[%c0_14, %c0_15] : memref<16x32xf32, #tpu.memory_space<vmem>>, vector<16x32xf32>
    tpu.vector_store %arg8[%c0_14, %c0_15], %22 {strides = array<i32>} : memref<16x32xf32, #tpu.memory_space<vmem>>, vector<16x32xf32>,
    %c0_i32_16 = arith.constant 0 : i32
    %24 = arith.cmpi eq, %arg1, %c0_i32_16 : i32
    %25 = arith.extui %24 : i1 to i32
    %c0_i32_17 = arith.constant 0 : i32
    %26 = arith.cmpi ne, %25, %c0_i32_17 : i32
    scf.if %26 {
      %c0_18 = arith.constant 0 : index
      %c0_19 = arith.constant 0 : index
      %27 = vector.load %arg8[%c0_18, %c0_19] : memref<16x32xf32, #tpu.memory_space<vmem>>, vector<16x32xf32>
      %c0_20 = arith.constant 0 : index
      %c0_21 = arith.constant 0 : index
      %28 = vector.load %arg6[%c0_20, %c0_21] : memref<1x32xf32, #tpu.memory_space<vmem>>, vector<1x32xf32>
      %29 = vector.broadcast %28 : vector<1x32xf32> to vector<16x32xf32>
      %30 = arith.addf %27, %29 : vector<16x32xf32>
      %c0_22 = arith.constant 0 : index
      %c0_23 = arith.constant 0 : index
      %31 = vector.load %arg7[%c0_22, %c0_23] : memref<16x32xf32, #tpu.memory_space<vmem>>, vector<16x32xf32>
      tpu.vector_store %arg7[%c0_22, %c0_23], %30 {strides = array<i32>} : memref<16x32xf32, #tpu.memory_space<vmem>>, vector<16x32xf32>,
    } else {
    }
    return
  }
  func.func @transform_0(%arg0: i32, %arg1: i32) -> (i32, i32) {
    %c0_i32 = arith.constant 0 : i32
    %c0_i32_0 = arith.constant 0 : i32
    return %arg0, %c0_i32 : i32, i32
  }
  func.func @transform_1(%arg0: i32, %arg1: i32) -> (i32, i32) {
    %c0_i32 = arith.constant 0 : i32
    %c0_i32_0 = arith.constant 0 : i32
    return %c0_i32, %arg1 : i32, i32
  }
  func.func @transform_2(%arg0: i32, %arg1: i32) -> (i32, i32) {
    %c0_i32 = arith.constant 0 : i32
    %c0_i32_0 = arith.constant 0 : i32
    return %c0_i32, %arg1 : i32, i32
  }
  func.func @transform_3(%arg0: i32, %arg1: i32) -> (i32, i32) {
    %c0_i32 = arith.constant 0 : i32
    %c0_i32_0 = arith.constant 0 : i32
    return %arg1, %c0_i32 : i32, i32
  }
  func.func @transform_4(%arg0: i32, %arg1: i32) -> (i32, i32) {
    %c0_i32 = arith.constant 0 : i32
    %c0_i32_0 = arith.constant 0 : i32
    %c0_i32_1 = arith.constant 0 : i32
    return %c0_i32, %c0_i32_0 : i32, i32
  }
  func.func @transform_5(%arg0: i32, %arg1: i32) -> (i32, i32) {
    %c0_i32 = arith.constant 0 : i32
    %c0_i32_0 = arith.constant 0 : i32
    return %arg0, %c0_i32 : i32, i32
  }
}

</mosaic_0001>

<llo_original>
// kernel: tpu_custom_call.1
$region0: #{tpu_custom_call.1}
  #allocation0 [shape = 'u32[]', space=smem, size = 0x4, offset = 0x4, fixed_abs, tag = 'smem constant byte address 0x4 - core index']
  #allocation1 [shape = 'u32[72,128]{1,0:T(1,128)}', space=vmem, size = 0x9000, scoped, tag = 'internal scratch']
  #allocation2 [shape = 'f32[16,32]{1,0:T(8,128)}', space=vmem, size = 0x2000, scoped, tag = 'scratch operand']
  %s0 = inlined_call_operand.vmem [shape: f32[16,32], index: 0, kind: input, shape index: {}]
  %s1 = inlined_call_operand.vmem [shape: bf16[32,64], index: 1, kind: input, shape index: {}]
  %s2 = inlined_call_operand.vmem [shape: f32[1,64], index: 2, kind: input, shape index: {}]
  %s3 = inlined_call_operand.vmem [shape: bf16[64,32], index: 3, kind: input, shape index: {}]
  %s4 = inlined_call_operand.vmem [shape: f32[1,32], index: 4, kind: input, shape index: {}]
  %s5 = inlined_call_operand.hbm [shape: f32[16,32], index: 5, kind: output, shape index: {}]
  %s6 = sld [smem:[#allocation0]]
  $region38: #{tpu_custom_call.1} parent=0
    _
  %s8 = ssub.s32 1, %s6
  %s9 = scalar_select 0, %s8, %s6
  $region1: #{tpu_custom_call.1} parent=0
    #allocation3 [shape = 'u8[8192]{0}', space=vmem, size = 0x2000, scoped, tag = 'output window, operand 0, single buffered']
    #allocation4 [shape = 's32[1]{0}', space=sflag, size = 0x4, scoped, tag = 'scoped memory for tpu_custom_call.1']
    %10 = vsyncpa [#allocation4], 0
    // Predicated region
    $region2: #{tpu_custom_call.1} parent=1 // pred_check
      _
    $region3: #{tpu_custom_call.1} parent=1 // pred_check_branch
      %12 = sbr.rel (0) target = $region5
    $region4: #{tpu_custom_call.1} parent=1 // pred_region
      _
    $region5: #{tpu_custom_call.1} parent=1 // pred_fallthru
      _
    // Predicated region
    $region6: #{tpu_custom_call.1} parent=1 // pred_check
      _
    $region7: #{tpu_custom_call.1} parent=1 // pred_check_branch
      %14 = sbr.rel (0) target = $region9
    $region8: #{tpu_custom_call.1} parent=1 // pred_region
      _
    $region9: #{tpu_custom_call.1} parent=1 // pred_fallthru
      _
    // Predicated region
    $region10: #{tpu_custom_call.1} parent=1 // pred_check
      _
    $region11: #{tpu_custom_call.1} parent=1 // pred_check_branch
      %16 = sbr.rel (0) target = $region13
    $region12: #{tpu_custom_call.1} parent=1 // pred_region
      _
    $region13: #{tpu_custom_call.1} parent=1 // pred_fallthru
      _
    // Predicated region
    $region14: #{tpu_custom_call.1} parent=1 // pred_check
      _
    $region15: #{tpu_custom_call.1} parent=1 // pred_check_branch
      %18 = sbr.rel (0) target = $region17
    $region16: #{tpu_custom_call.1} parent=1 // pred_region
      _
    $region17: #{tpu_custom_call.1} parent=1 // pred_fallthru
      _
    // Predicated region
    $region18: #{tpu_custom_call.1} parent=1 // pred_check
      _
    $region19: #{tpu_custom_call.1} parent=1 // pred_check_branch
      %20 = sbr.rel (0) target = $region21
    $region20: #{tpu_custom_call.1} parent=1 // pred_region
      _
    $region21: #{tpu_custom_call.1} parent=1 // pred_fallthru
      _
    %p22 = scmp.eq.s32.totalorder 0, 0
    // Predicated region
    $region22: #{tpu_custom_call.1} parent=1 // pred_check
      %p23 = pneg %p22
    $region23: #{tpu_custom_call.1} parent=1 // pred_check_branch
      %25 = sbr.rel (%p23) target = $region25
    $region24: #{tpu_custom_call.1} parent=1 // pred_region
      %vm26 = vcmask 261120
      %27 = vst.msk [vmem:[#allocation2] sm:$0xff] %vm26, 0.0
      %28 = vst.msk [vmem:[#allocation2 + $0x8] sm:$0xff] %vm26, 0.0
    $region25: #{tpu_custom_call.1} parent=1 // pred_fallthru
      _
    %v29 = vld [vmem:[%s0] sm:$0xff]
    %v30 = vld [vmem:[%s0 + $0x8] sm:$0xff]
    %v31 = vpack.c.bf16 %v30, %v29
    %v32 = vld [vmem:[%s1] sm:$0xf]
    %v33 = vld [vmem:[%s1 + $0x4] sm:$0xf]
    %v34 = vld [vmem:[%s1 + $0x8] sm:$0xf]
    %v35 = vld [vmem:[%s1 + $0xc] sm:$0xf]
    %v36 = vld [vmem:[%s2] sm:$0x1]
    %v38 = vperm.slane %v36, 0
    %v44 = vunpack.c.l.b16 %v32
    %v45 = vunpack.c.l.b16 %v33
    %v46 = vunpack.c.l.b16 %v34
    %v47 = vunpack.c.l.b16 %v35
    %v48 = vpack.c.b16 %v45, %v44
    %v49 = vpack.c.b16 %v47, %v46
    %vm52 = vcmask 261120
    %v54 = vsel %vm52, %v31, 0
    %56 = vmatpush.bf16.msra.mxu0 0
    %57 = vmatpush.bf16.msra.mxu0 0
    %58 = vmatpush.bf16.msra.mxu0 0
    %59 = vmatpush.bf16.msra.mxu0 0
    %60 = vmatpush.bf16.msra.mxu0 0
    %61 = vmatpush.bf16.msra.mxu0 0
    %62 = vmatpush.bf16.msra.mxu0 %v49
    %63 = vmatpush.bf16.msra.mxu0 %v48
    %64 = vmatmul.bf16.gmra.mxu0 %v54
    %v65 = vpop.f32.mrf.mxu0
    %v66 = vadd.f32 %v38, %v65
    %v67 = vpop.f32.mrf.mxu0
    %v68 = vadd.f32 %v38, %v67
    %69 = vdwg.mxu0
    %v70 = vmul.f32 %v66, 0.5
    %v71 = vmul.f32 %v68, 0.5
    %v72 = vmul.f32 %v66, 0.70710677
    %v73 = vmul.f32 %v68, 0.70710677
    %v74 = vmul.f32 %v72, %v72
    %v75 = vmin.f32 16.0, %v74
    %v76 = vmul.f32 %v75, 2.1237322e-06
    %v77 = vadd.f32 %v76, 0.00028619796
    %v78 = vmul.f32 %v75, %v77
    %v79 = vadd.f32 %v78, 0.0036580483
    %v80 = vmul.f32 %v75, %v79
    %v81 = vadd.f32 %v80, 0.05243302
    %v82 = vmul.f32 %v75, %v81
    %v83 = vadd.f32 %v82, 0.18741608
    %v84 = vmul.f32 %v75, %v83
    %v85 = vadd.f32 %v84, 1.1283791
    %v86 = vmul.f32 %v72, %v85
    %v87 = vmul.f32 %v75, 3.8918573e-05
    %v88 = vadd.f32 %v87, 0.001143296
    %v89 = vmul.f32 %v75, %v88
    %v90 = vadd.f32 %v89, 0.014752088
    %v91 = vmul.f32 %v75, %v90
    %v92 = vadd.f32 %v91, 0.112945676
    %v93 = vmul.f32 %v75, %v92
    %v94 = vadd.f32 %v93, 0.4994258
    %v95 = vmul.f32 %v75, %v94
    %v96 = vadd.f32 %v95, 1.0
    %v97 = vrcp.pop %v96
    %v98 = vmul.f32 %v96, %v97
    %v99 = vsub.f32 1.0, %v98
    %v100 = vmul.f32 %v97, %v99
    %v101 = vadd.f32 %v97, %v100
    %vm102 = vweird.f32 %v96
    %vm103 = vweird.f32 %v97
    %vm104 = vmor %vm102, %vm103
    %v105 = vsel %vm104, %v97, %v101
    %v106 = vand.u32 2147483647, %v96
    %vm107 = vcmp.eq.f32.partialorder %v106, 8.507059e+37
    %v108 = vand.u32 %v96, 2147483648
    %v109 = vor.u32 1.1754944e-38, %v108
    %v110 = vsel %vm107, %v109, %v105
    %v111 = vmul.f32 %v86, %v110
    %v112 = vmin.f32 %v111, 1.0
    %v113 = vmax.f32 %v112, -1.0
    %v114 = vmul.f32 %v73, %v73
    %v115 = vmin.f32 16.0, %v114
    %v116 = vmul.f32 %v115, 2.1237322e-06
    %v117 = vadd.f32 %v116, 0.00028619796
    %v118 = vmul.f32 %v115, %v117
    %v119 = vadd.f32 %v118, 0.0036580483
    %v120 = vmul.f32 %v115, %v119
    %v121 = vadd.f32 %v120, 0.05243302
    %v122 = vmul.f32 %v115, %v121
    %v123 = vadd.f32 %v122, 0.18741608
    %v124 = vmul.f32 %v115, %v123
    %v125 = vadd.f32 %v124, 1.1283791
    %v126 = vmul.f32 %v73, %v125
    %v127 = vmul.f32 %v115, 3.8918573e-05
    %v128 = vadd.f32 %v127, 0.001143296
    %v129 = vmul.f32 %v115, %v128
    %v130 = vadd.f32 %v129, 0.014752088
    %v131 = vmul.f32 %v115, %v130
    %v132 = vadd.f32 %v131, 0.112945676
    %v133 = vmul.f32 %v115, %v132
    %v134 = vadd.f32 %v133, 0.4994258
    %v135 = vmul.f32 %v115, %v134
    %v136 = vadd.f32 %v135, 1.0
    %v137 = vrcp.pop %v136
    %v138 = vmul.f32 %v136, %v137
    %v139 = vsub.f32 1.0, %v138
    %v140 = vmul.f32 %v137, %v139
    %v141 = vadd.f32 %v137, %v140
    %vm142 = vweird.f32 %v136
    %vm143 = vweird.f32 %v137
    %vm144 = vmor %vm142, %vm143
    %v145 = vsel %vm144, %v137, %v141
    %v146 = vand.u32 2147483647, %v136
    %vm147 = vcmp.eq.f32.partialorder %v146, 8.507059e+37
    %v148 = vand.u32 %v136, 2147483648
    %v149 = vor.u32 1.1754944e-38, %v148
    %v150 = vsel %vm147, %v149, %v145
    %v151 = vmul.f32 %v126, %v150
    %v152 = vmin.f32 %v151, 1.0
    %v153 = vmax.f32 %v152, -1.0
    %v154 = vadd.f32 %v113, 1.0
    %v155 = vadd.f32 %v153, 1.0
    %v156 = vmul.f32 %v70, %v154
    %v157 = vmul.f32 %v71, %v155
    %v158 = vpack.c.bf16 %v157, %v156
    %v159 = vld [vmem:[#allocation2] sm:$0xff]
    %v160 = vld [vmem:[#allocation2 + $0x8] sm:$0xff]
    %v161 = vld [vmem:[%s3] sm:$0xf]
    %v162 = vld [vmem:[%s3 + $0x4] sm:$0xf]
    %v163 = vld [vmem:[%s3 + $0x8] sm:$0xf]
    %v164 = vld [vmem:[%s3 + $0xc] sm:$0xf]
    %v165 = vld [vmem:[%s3 + $0x10] sm:$0xf]
    %v166 = vld [vmem:[%s3 + $0x14] sm:$0xf]
    %v167 = vld [vmem:[%s3 + $0x18] sm:$0xf]
    %v168 = vld [vmem:[%s3 + $0x1c] sm:$0xf]
    %v177 = vunpack.c.l.b16 %v161
    %v178 = vunpack.c.l.b16 %v162
    %v179 = vunpack.c.l.b16 %v163
    %v180 = vunpack.c.l.b16 %v164
    %v181 = vunpack.c.l.b16 %v165
    %v182 = vunpack.c.l.b16 %v166
    %v183 = vunpack.c.l.b16 %v167
    %v184 = vunpack.c.l.b16 %v168
    %v185 = vpack.c.b16 %v178, %v177
    %v186 = vpack.c.b16 %v180, %v179
    %v187 = vpack.c.b16 %v182, %v181
    %v188 = vpack.c.b16 %v184, %v183
    %vm193 = vcmask 523264
    %v195 = vsel %vm193, %v158, 0
    %197 = vmatpush.bf16.msra.mxu0 0
    %198 = vmatpush.bf16.msra.mxu0 0
    %199 = vmatpush.bf16.msra.mxu0 0
    %200 = vmatpush.bf16.msra.mxu0 0
    %201 = vmatpush.bf16.msra.mxu0 %v188
    %202 = vmatpush.bf16.msra.mxu0 %v187
    %203 = vmatpush.bf16.msra.mxu0 %v186
    %204 = vmatpush.bf16.msra.mxu0 %v185
    %205 = vmatmul.bf16.gmra.mxu0 %v195
    %v206 = vpop.f32.mrf.mxu0
    %v207 = vadd.f32 0.0, %v206
    %v208 = vpop.f32.mrf.mxu0
    %v209 = vadd.f32 0.0, %v208
    %210 = vdwg.mxu0
    %v211 = vadd.f32 %v159, %v207
    %v212 = vadd.f32 %v160, %v209
    %213 = vst.msk [vmem:[#allocation2] sm:$0xff] %vm52, %v211
    %214 = vst.msk [vmem:[#allocation2 + $0x8] sm:$0xff] %vm52, %v212
    // Predicated region
    $region26: #{tpu_custom_call.1} parent=1 // pred_check
      %p215 = pneg %p22
    $region27: #{tpu_custom_call.1} parent=1 // pred_check_branch
      %217 = sbr.rel (%p215) target = $region29
    $region28: #{tpu_custom_call.1} parent=1 // pred_region
      %v218 = vld [vmem:[#allocation2] sm:$0xff]
      %v219 = vld [vmem:[#allocation2 + $0x8] sm:$0xff]
      %v220 = vld [vmem:[%s4] sm:$0x1]
      %v222 = vperm.slane %v220, 0
      %v224 = vadd.f32 %v218, %v222
      %v225 = vadd.f32 %v219, %v222
      %226 = vst.msk [vmem:[#allocation3] sm:$0xff] %vm52, %v224
      %227 = vst.msk [vmem:[#allocation3 + $0x8] sm:$0xff] %vm52, %v225
    $region29: #{tpu_custom_call.1} parent=1 // pred_fallthru
      _
    // Predicated region
    $region30: #{tpu_custom_call.1} parent=1 // pred_check
      _
    $region31: #{tpu_custom_call.1} parent=1 // pred_check_branch
      %229 = sbr.rel (0) target = $region33
    $region32: #{tpu_custom_call.1} parent=1 // pred_region
      %231 = vsyncadd [#allocation4], 0
      %s232 = sshll.u32 [#allocation3], 4
      %s233 = int_to_ptr.vmem [resolvable:$true] %s232
      %s234 = sshll.u32 %s5, 4
      %s235 = int_to_ptr.hbm [resolvable:$true] %s234
      %240 = dma.vmem_to_hbm [thread:$0]  %s233, 256, %s235, [#allocation4], 128, 128, 8
    $region33: #{tpu_custom_call.1} parent=1 // pred_fallthru
      _
    // Predicated region
    $region34: #{tpu_custom_call.1} parent=1 // pred_check
      _
    $region35: #{tpu_custom_call.1} parent=1 // pred_check_branch
      %242 = sbr.rel (0) target = $region37
    $region36: #{tpu_custom_call.1} parent=1 // pred_region
      %244 = dma.done [#allocation4], 256
    $region37: #{tpu_custom_call.1} parent=1 // pred_fallthru
      _
    %245 = vsyncpa [#allocation4], 1

</llo_original>
